<compile_context>
chip_gen: v5e
topology: v5e:2x2
jax: 0.10.0
libtpu: 0.0.40
codegen_flags: <defaults>
</compile_context>

<pallas_src>
import math

import jax
import jax.numpy as jnp
from jax.experimental import pallas as pl
from jax.experimental.pallas import tpu as pltpu

LANE = 128  # TPU lane width; also the fused-head / MVN segment width


def evaluate_kernel(state_ref, action_ref, wA_ref, wB_ref, bias_ref, out_ref):
    f32 = jnp.float32
    bf16 = jnp.bfloat16
    H = wA_ref.shape[0]           # hidden size (128)
    A = action_ref.shape[1]       # action dim
    S = state_ref.shape[1]        # state dim

    # --- packed weight slab A (H, 5H + LANE): [ w2 | w_gates | w_heads ] ---
    w2 = wA_ref[:, 0:2 * H]
    wg = wA_ref[:, 2 * H:5 * H]
    wh = wA_ref[:, 5 * H:5 * H + LANE]

    # --- packed weight slab B (S_pad + 2H, H): [ w1 ; w3 ] stacked on rows ---
    s_pad = wB_ref.shape[0] - 2 * H          # w1 rows padded to a 16-multiple
    w1 = wB_ref[0:S, :]
    w3 = wB_ref[s_pad:s_pad + 2 * H, :]

    # --- packed bias slab (1, 7H + 2*LANE), all 128-aligned segments ---
    b1 = bias_ref[:, 0:H]
    b2 = bias_ref[:, H:3 * H]
    b3 = bias_ref[:, 3 * H:4 * H]
    bg = bias_ref[:, 4 * H:7 * H]                     # [i|g|o] gate bias (bih+bhh)
    bh = bias_ref[:, 7 * H:7 * H + LANE]              # fused head bias
    neg_half_inv_var = bias_ref[:, 7 * H + LANE:7 * H + LANE + A]  # -0.5*exp(-logvar)

    # --- critic MLP: bf16 MXU matmuls, f32 accumulate + f32 elementwise ---
    x = state_ref[...].astype(bf16)
    x = jnp.maximum(jnp.dot(x, w1, preferred_element_type=f32) + b1, 0.0)
    x = jnp.maximum(jnp.dot(x.astype(bf16), w2, preferred_element_type=f32) + b2, 0.0)
    x = jnp.maximum(jnp.dot(x.astype(bf16), w3, preferred_element_type=f32) + b3, 0.0)

    # --- critic LSTM, one step, hidden=None (h0=c0=0) specialization ---
    # whh @ h0 == 0 and f_g * c0 == 0, so only the i|g|o gate columns are used.
    # sigmoid(x) == 0.5*(tanh(0.5*x)+1): single EUP push instead of exp+recip.
    gates = jnp.dot(x.astype(bf16), wg, preferred_element_type=f32) + bg
    i_g = 0.5 * (jnp.tanh(0.5 * gates[:, 0:H]) + 1.0)
    g_g = jnp.tanh(gates[:, H:2 * H])
    o_g = 0.5 * (jnp.tanh(0.5 * gates[:, 2 * H:3 * H]) + 1.0)
    h_new = o_g * jnp.tanh(i_g * g_g)                 # c_new = i_g * g_g

    # --- fused heads: one lane-dense (B, 128) matmul ---
    # lane 0 = critic_fc4 value, lanes [1:1+A] = actor_fc4 pre-tanh
    heads = jnp.dot(h_new.astype(bf16), wh, preferred_element_type=f32) + bh
    mean = jnp.tanh(heads[:, 1:1 + A])

    # --- MVN log-prob, data-dependent part only: -0.5 * mahalanobis ---
    diff = action_ref[...] - mean
    q = jnp.sum(diff * diff * neg_half_inv_var, axis=-1, keepdims=True)  # (B, 1)

    # --- single lane-dense output slab: lane 0 = value, lane 1 = q ---
    lane = jax.lax.broadcasted_iota(jnp.int32, out_ref.shape, 1)
    out_ref[...] = jnp.where(lane == 1, q, heads)


def prepare_inputs(params):
    """One-time weight repack (per parameter update, NOT per forward call)."""
    f32, bf16 = jnp.float32, jnp.bfloat16
    S, H = params["w1"].shape
    A = params["wa4"].shape[1]

    # Drop the forget-gate columns (dead for the hidden=None path).
    def iogo_cols(m):  # [i|f|g|o] -> [i|g|o]
        return jnp.concatenate([m[:, 0:H], m[:, 2 * H:3 * H], m[:, 3 * H:4 * H]],
                               axis=1)

    wg = iogo_cols(params["wih"])
    bg = iogo_cols(params["bih"] + params["bhh"])

    # Fused heads: [ critic_fc4 (H,1) | actor_fc4 (H,A) | zero pad ] -> (H, 128)
    wh = jnp.concatenate(
        [params["wc4"], params["wa4"], jnp.zeros((H, LANE - A - 1), f32)], axis=1)
    bh = jnp.concatenate(
        [params["bc4"], params["ba4"], jnp.zeros((1, LANE - A - 1), f32)], axis=1)

    # Weight slab A (H, 5H+128): [ w2 | wg | wh ], 128-aligned column segments.
    wA = jnp.concatenate([params["w2"], wg, wh], axis=1).astype(bf16)

    # Weight slab B (S_pad+2H, H): [ w1 ; w3 ], w1 rows zero-padded to a
    # 16-multiple so the w3 row offset stays bf16-tile aligned.
    s_pad = ((S + 15) // 16) * 16
    w1p = jnp.concatenate(
        [params["w1"], jnp.zeros((s_pad - S, H), f32)], axis=0)
    wB = jnp.concatenate([w1p, params["w3"]], axis=0).astype(bf16)

    # MVN segment: -0.5 * 1/var in lanes [0:A], zeros elsewhere.
    mvn = jnp.concatenate(
        [-0.5 * jnp.exp(-params["logvar"]), jnp.zeros((1, LANE - A), f32)], axis=1)

    bias = jnp.concatenate(
        [params["b1"], params["b2"], params["b3"], bg, bh, mvn], axis=1)  # (1, 7H+256)

    return {"wA": wA, "wB": wB, "bias": bias}


def evaluate_pallas(state, action, params, packed=None, batch_tile=None):
    """ActorCritic_Clip.evaluate(state, action, hidden=None) -> (logp, value, entropy).

    batch_tile: if set and it divides B (< B), run a batch-grid pipeline with
    dimension_semantics=("parallel",) (2x TC on v7x) and weights resident.
    Size the tile against scoped VMEM: v7x ~2048-4096 rows, v6e up to ~8192.
    """
    if packed is None:
        packed = prepare_inputs(params)
    B, S = state.shape
    A = action.shape[-1]
    wA, wB, bias = packed["wA"], packed["wB"], packed["bias"]
    H = wA.shape[0]

    cost = pl.CostEstimate(
        flops=2 * B * (S * H + H * 2 * H + 2 * H * H + H * 3 * H + H * LANE),
        transcendentals=B * (4 * H + A),
        bytes_accessed=(state.size * 4 + action.size * 4 + wA.size * 2
                        + wB.size * 2 + bias.size * 4 + B * LANE * 4),
    )

    if batch_tile is not None and batch_tile < B and B % batch_tile == 0:
        # Batch-grid path: weight slabs keep a constant block index so the
        # pipeline leaves them resident; state/action/out blocks are pipelined.
        bt = batch_tile
        out = pl.pallas_call(
            evaluate_kernel,
            out_shape=jax.ShapeDtypeStruct((B, LANE), jnp.float32),
            grid=(B // bt,),
            in_specs=[
                pl.BlockSpec((bt, S), lambda b: (b, 0)),
                pl.BlockSpec((bt, A), lambda b: (b, 0)),
                pl.BlockSpec(wA.shape, lambda b: (0, 0)),
                pl.BlockSpec(wB.shape, lambda b: (0, 0)),
                pl.BlockSpec(bias.shape, lambda b: (0, 0)),
            ],
            out_specs=pl.BlockSpec((bt, LANE), lambda b: (b, 0)),
            compiler_params=pltpu.CompilerParams(
                dimension_semantics=("parallel",)),
            cost_estimate=cost,
        )(state, action, wA, wB, bias)
    else:
        # Small-batch path: whole problem fits VMEM, single gridless call.
        vmem = pl.BlockSpec(memory_space=pltpu.MemorySpace.VMEM)
        out = pl.pallas_call(
            evaluate_kernel,
            out_shape=jax.ShapeDtypeStruct((B, LANE), jnp.float32),
            in_specs=[vmem] * 5,
            out_specs=vmem,
            cost_estimate=cost,
        )(state, action, wA, wB, bias)

    # Constant (state/action independent) pieces hoisted out of the kernel.
    sum_logvar = jnp.sum(params["logvar"])
    k = float(A)
    log2pi = math.log(2.0 * math.pi)
    value = out[:, 0:1]                                     # (B, 1)
    logp = out[:, 1] - 0.5 * (k * log2pi + sum_logvar)      # (B,)
    ent = jnp.full((B,), 0.5 * k * (1.0 + log2pi), jnp.float32) + 0.5 * sum_logvar
    return logp, value, ent


# ----------------------------- references -----------------------------------

def evaluate_reference_f32(state, action, params):
    """Faithful f32 reference of ActorCritic_Clip.evaluate (hidden=None)."""
    H = params["w1"].shape[1]
    x = jax.nn.relu(state @ params["w1"] + params["b1"])
    x = jax.nn.relu(x @ params["w2"] + params["b2"])
    x = jax.nn.relu(x @ params["w3"] + params["b3"])
    B = state.shape[0]
    h = jnp.zeros((B, H), jnp.float32)
    c = jnp.zeros((B, H), jnp.float32)
    gates = x @ params["wih"] + params["bih"] + h @ params["whh"] + params["bhh"]
    i = jax.nn.sigmoid(gates[:, :H])
    f = jax.nn.sigmoid(gates[:, H:2 * H])
    g = jnp.tanh(gates[:, 2 * H:3 * H])
    o = jax.nn.sigmoid(gates[:, 3 * H:4 * H])
    h_new = o * jnp.tanh(f * c + i * g)
    value = h_new @ params["wc4"] + params["bc4"]
    mean = jnp.tanh(h_new @ params["wa4"] + params["ba4"])
    logvar = params["logvar"]
    var = jnp.exp(logvar)
    diff = action - mean
    k = action.shape[-1]
    logp = -0.5 * (jnp.sum(diff * diff / var, axis=-1)
                   + k * jnp.log(2 * jnp.pi) + jnp.sum(logvar))
    ent = 0.5 * k * (1.0 + jnp.log(2 * jnp.pi)) + 0.5 * jnp.sum(logvar)
    return logp, value, jnp.full_like(logp, ent)


def evaluate_reference_bf16(state, action, params):
    """Reference matching the kernel's bf16-matmul / f32-accumulate precision."""
    bf16, f32 = jnp.bfloat16, jnp.float32
    dot = lambda a, w: jnp.dot(a.astype(bf16), w.astype(bf16),
                               preferred_element_type=f32)
    H = params["w1"].shape[1]
    x = jax.nn.relu(dot(state, params["w1"]) + params["b1"])
    x = jax.nn.relu(dot(x, params["w2"]) + params["b2"])
    x = jax.nn.relu(dot(x, params["w3"]) + params["b3"])
    gates = dot(x, params["wih"]) + params["bih"] + params["bhh"]
    i = jax.nn.sigmoid(gates[:, :H])
    g = jnp.tanh(gates[:, 2 * H:3 * H])
    o = jax.nn.sigmoid(gates[:, 3 * H:4 * H])
    h_new = o * jnp.tanh(i * g)
    value = dot(h_new, params["wc4"]) + params["bc4"]
    mean = jnp.tanh(dot(h_new, params["wa4"]) + params["ba4"])
    logvar = params["logvar"]
    var = jnp.exp(logvar)
    diff = action - mean
    k = action.shape[-1]
    logp = -0.5 * (jnp.sum(diff * diff / var, axis=-1)
                   + k * jnp.log(2 * jnp.pi) + jnp.sum(logvar))
    ent = 0.5 * k * (1.0 + jnp.log(2 * jnp.pi)) + 0.5 * jnp.sum(logvar)
    return logp, value, jnp.full_like(logp, ent)


def make_params(key, state_dim, action_dim, hidden, action_std_init=0.6):
    ks = jax.random.split(key, 12)
    n = lambda k, shape, scale: (scale * jax.random.normal(k, shape)).astype(jnp.float32)
    H = hidden
    return {
        # critic MLP (weights stored as (in, out) = PyTorch weight transposed)
        "w1": n(ks[0], (state_dim, H), 0.2), "b1": n(ks[1], (1, H), 0.1),
        "w2": n(ks[2], (H, 2 * H), 0.08),    "b2": n(ks[3], (1, 2 * H), 0.1),
        "w3": n(ks[4], (2 * H, H), 0.06),    "b3": n(ks[5], (1, H), 0.1),
        # critic LSTM: [i|f|g|o] gate concat along the out axis (torch layout)
        "wih": n(ks[6], (H, 4 * H), 0.06), "whh": n(ks[7], (H, 4 * H), 0.06),
        "bih": n(ks[8], (1, 4 * H), 0.1),  "bhh": n(ks[9], (1, 4 * H), 0.1),
        # heads
        "wc4": n(ks[10], (H, 1), 0.1),  "bc4": jnp.zeros((1, 1), jnp.float32),
        "wa4": n(ks[11], (H, action_dim), 0.1),
        "ba4": jnp.zeros((1, action_dim), jnp.float32),
        # diag covariance: action_var = action_std_init ** 2
        "logvar": jnp.full((1, action_dim),
                           math.log(action_std_init * action_std_init),
                           jnp.float32),
    }


if __name__ == "__main__":
    STATE_DIM, ACTION_DIM, HIDDEN, BATCH = 16, 8, 128, 8

    key = jax.random.PRNGKey(0)
    k_state, k_action, k_params = jax.random.split(key, 3)
    state = jax.random.normal(k_state, (BATCH, STATE_DIM), dtype=jnp.float32)
    action = jax.random.normal(k_action, (BATCH, ACTION_DIM), dtype=jnp.float32)
    params = make_params(k_params, STATE_DIM, ACTION_DIM, HIDDEN)
    packed = prepare_inputs(params)

    # --- small-batch gridless path -------------------------------------------
    logp, value, ent = jax.block_until_ready(
        evaluate_pallas(state, action, params, packed))

    # Tight check vs. a reference with the same bf16-matmul / f32-accum precision.
    logp_m, value_m, ent_m = evaluate_reference_bf16(state, action, params)
    assert jnp.allclose(logp, logp_m, atol=1e-3, rtol=1e-3)
    assert jnp.allclose(value, value_m, atol=1e-3, rtol=1e-3)
    assert jnp.allclose(ent, ent_m, atol=1e-5, rtol=1e-5)

    # Loose sanity check vs. the faithful f32 reference (bf16 MXU tolerance).
    logp_r, value_r, ent_r = evaluate_reference_f32(state, action, params)
    assert jnp.allclose(logp, logp_r, atol=1e-1, rtol=1e-1)
    assert jnp.allclose(value, value_r, atol=1e-1, rtol=1e-1)
    assert jnp.allclose(ent, ent_r, atol=1e-5, rtol=1e-5)

    # torch-matching output shapes
    assert logp.shape == (BATCH,) and value.shape == (BATCH, 1) and ent.shape == (BATCH,)

    # --- batch-grid path (PPO-minibatch variant; "parallel" axis for megacore) --
    BIG, TILE = 64, 16
    kb_s, kb_a = jax.random.split(jax.random.PRNGKey(1), 2)
    state_b = jax.random.normal(kb_s, (BIG, STATE_DIM), dtype=jnp.float32)
    action_b = jax.random.normal(kb_a, (BIG, ACTION_DIM), dtype=jnp.float32)
    logp_b, value_b, ent_b = jax.block_until_ready(
        evaluate_pallas(state_b, action_b, params, packed, batch_tile=TILE))
    logp_bm, value_bm, _ = evaluate_reference_bf16(state_b, action_b, params)
    assert jnp.allclose(logp_b, logp_bm, atol=1e-3, rtol=1e-3)
    assert jnp.allclose(value_b, value_bm, atol=1e-3, rtol=1e-3)
    assert logp_b.shape == (BIG,) and value_b.shape == (BIG, 1)

    print("KERNEL_OK")
</pallas_src>

<mosaic_0001>
module attributes {stable_mosaic.version = 11 : i64} {
  func.func @evaluate_kernel(%arg0: memref<8x16xf32, #tpu.memory_space<vmem>>, %arg1: memref<8x8xf32, #tpu.memory_space<vmem>>, %arg2: memref<128x768xbf16, #tpu.memory_space<vmem>>, %arg3: memref<272x128xbf16, #tpu.memory_space<vmem>>, %arg4: memref<1x1152xf32, #tpu.memory_space<vmem>>, %arg5: memref<8x128xf32, #tpu.memory_space<vmem>>) attributes {dimension_semantics = [], scalar_prefetch = 0 : i64, scratch_operands = 0 : i64, tpu.core_type = #tpu.core_type<tc>} {
    %c0 = arith.constant 0 : index
    %c0_0 = arith.constant 0 : index
    %0 = vector.load %arg2[%c0, %c0_0] : memref<128x768xbf16, #tpu.memory_space<vmem>>, vector<128x256xbf16>
    %c0_1 = arith.constant 0 : index
    %c256 = arith.constant 256 : index
    %1 = vector.load %arg2[%c0_1, %c256] : memref<128x768xbf16, #tpu.memory_space<vmem>>, vector<128x384xbf16>
    %c0_2 = arith.constant 0 : index
    %c640 = arith.constant 640 : index
    %2 = vector.load %arg2[%c0_2, %c640] : memref<128x768xbf16, #tpu.memory_space<vmem>>, vector<128x128xbf16>
    %c0_3 = arith.constant 0 : index
    %c0_4 = arith.constant 0 : index
    %3 = vector.load %arg3[%c0_3, %c0_4] : memref<272x128xbf16, #tpu.memory_space<vmem>>, vector<16x128xbf16>
    %c16 = arith.constant 16 : index
    %c0_5 = arith.constant 0 : index
    %4 = vector.load %arg3[%c16, %c0_5] : memref<272x128xbf16, #tpu.memory_space<vmem>>, vector<256x128xbf16>
    %c0_6 = arith.constant 0 : index
    %c0_7 = arith.constant 0 : index
    %5 = vector.load %arg4[%c0_6, %c0_7] : memref<1x1152xf32, #tpu.memory_space<vmem>>, vector<1x128xf32>
    %c0_8 = arith.constant 0 : index
    %c128 = arith.constant 128 : index
    %6 = vector.load %arg4[%c0_8, %c128] : memref<1x1152xf32, #tpu.memory_space<vmem>>, vector<1x256xf32>
    %c0_9 = arith.constant 0 : index
    %c384 = arith.constant 384 : index
    %7 = vector.load %arg4[%c0_9, %c384] : memref<1x1152xf32, #tpu.memory_space<vmem>>, vector<1x128xf32>
    %c0_10 = arith.constant 0 : index
    %c512 = arith.constant 512 : index
    %8 = vector.load %arg4[%c0_10, %c512] : memref<1x1152xf32, #tpu.memory_space<vmem>>, vector<1x384xf32>
    %c0_11 = arith.constant 0 : index
    %c896 = arith.constant 896 : index
    %9 = vector.load %arg4[%c0_11, %c896] : memref<1x1152xf32, #tpu.memory_space<vmem>>, vector<1x128xf32>
    %c0_12 = arith.constant 0 : index
    %c1024 = arith.constant 1024 : index
    %10 = vector.load %arg4[%c0_12, %c1024] : memref<1x1152xf32, #tpu.memory_space<vmem>>, vector<1x8xf32>
    %c0_13 = arith.constant 0 : index
    %c0_14 = arith.constant 0 : index
    %11 = vector.load %arg0[%c0_13, %c0_14] : memref<8x16xf32, #tpu.memory_space<vmem>>, vector<8x16xf32>
    %12 = arith.truncf %11 : vector<8x16xf32> to vector<8x16xbf16>
    %cst = arith.constant dense<0.000000e+00> : vector<8x128xf32>
    %13 = tpu.matmul %12, %3, %cst {dimension_numbers = #tpu.dot_dimension_numbers<[1], [0], [0], [1], [0, 0, 1, 1], [], []>} : vector<8x16xbf16>, vector<16x128xbf16>, vector<8x128xf32> -> vector<8x128xf32>
    %14 = vector.broadcast %5 : vector<1x128xf32> to vector<8x128xf32>
    %15 = arith.addf %13, %14 : vector<8x128xf32>
    %cst_15 = arith.constant 0.000000e+00 : f32
    %16 = vector.broadcast %cst_15 : f32 to vector<8x128xf32>
    %17 = arith.maximumf %15, %16 : vector<8x128xf32>
    %18 = arith.truncf %17 : vector<8x128xf32> to vector<8x128xbf16>
    %cst_16 = arith.constant dense<0.000000e+00> : vector<8x256xf32>
    %19 = tpu.matmul %18, %0, %cst_16 {dimension_numbers = #tpu.dot_dimension_numbers<[1], [0], [0], [1], [0, 0, 1, 1], [], []>} : vector<8x128xbf16>, vector<128x256xbf16>, vector<8x256xf32> -> vector<8x256xf32>
    %20 = vector.broadcast %6 : vector<1x256xf32> to vector<8x256xf32>
    %21 = arith.addf %19, %20 : vector<8x256xf32>
    %cst_17 = arith.constant 0.000000e+00 : f32
    %22 = vector.broadcast %cst_17 : f32 to vector<8x256xf32>
    %23 = arith.maximumf %21, %22 : vector<8x256xf32>
    %24 = arith.truncf %23 : vector<8x256xf32> to vector<8x256xbf16>
    %cst_18 = arith.constant dense<0.000000e+00> : vector<8x128xf32>
    %25 = tpu.matmul %24, %4, %cst_18 {dimension_numbers = #tpu.dot_dimension_numbers<[1], [0], [0], [1], [0, 0, 1, 1], [], []>} : vector<8x256xbf16>, vector<256x128xbf16>, vector<8x128xf32> -> vector<8x128xf32>
    %26 = vector.broadcast %7 : vector<1x128xf32> to vector<8x128xf32>
    %27 = arith.addf %25, %26 : vector<8x128xf32>
    %cst_19 = arith.constant 0.000000e+00 : f32
    %28 = vector.broadcast %cst_19 : f32 to vector<8x128xf32>
    %29 = arith.maximumf %27, %28 : vector<8x128xf32>
    %30 = arith.truncf %29 : vector<8x128xf32> to vector<8x128xbf16>
    %cst_20 = arith.constant dense<0.000000e+00> : vector<8x384xf32>
    %31 = tpu.matmul %30, %1, %cst_20 {dimension_numbers = #tpu.dot_dimension_numbers<[1], [0], [0], [1], [0, 0, 1, 1], [], []>} : vector<8x128xbf16>, vector<128x384xbf16>, vector<8x384xf32> -> vector<8x384xf32>
    %32 = vector.broadcast %8 : vector<1x384xf32> to vector<8x384xf32>
    %33 = arith.addf %31, %32 : vector<8x384xf32>
    %34 = vector.extract_strided_slice %33 {offsets = [0, 0], sizes = [8, 128], strides = [1, 1]} : vector<8x384xf32> to vector<8x128xf32>
    %cst_21 = arith.constant 5.000000e-01 : f32
    %35 = vector.broadcast %cst_21 : f32 to vector<8x128xf32>
    %36 = arith.mulf %35, %34 : vector<8x128xf32>
    %37 = math.tanh %36 : vector<8x128xf32>
    %cst_22 = arith.constant 1.000000e+00 : f32
    %38 = vector.broadcast %cst_22 : f32 to vector<8x128xf32>
    %39 = arith.addf %37, %38 : vector<8x128xf32>
    %cst_23 = arith.constant 5.000000e-01 : f32
    %40 = vector.broadcast %cst_23 : f32 to vector<8x128xf32>
    %41 = arith.mulf %40, %39 : vector<8x128xf32>
    %42 = vector.extract_strided_slice %33 {offsets = [0, 128], sizes = [8, 128], strides = [1, 1]} : vector<8x384xf32> to vector<8x128xf32>
    %43 = math.tanh %42 : vector<8x128xf32>
    %44 = vector.extract_strided_slice %33 {offsets = [0, 256], sizes = [8, 128], strides = [1, 1]} : vector<8x384xf32> to vector<8x128xf32>
    %cst_24 = arith.constant 5.000000e-01 : f32
    %45 = vector.broadcast %cst_24 : f32 to vector<8x128xf32>
    %46 = arith.mulf %45, %44 : vector<8x128xf32>
    %47 = math.tanh %46 : vector<8x128xf32>
    %cst_25 = arith.constant 1.000000e+00 : f32
    %48 = vector.broadcast %cst_25 : f32 to vector<8x128xf32>
    %49 = arith.addf %47, %48 : vector<8x128xf32>
    %cst_26 = arith.constant 5.000000e-01 : f32
    %50 = vector.broadcast %cst_26 : f32 to vector<8x128xf32>
    %51 = arith.mulf %50, %49 : vector<8x128xf32>
    %52 = arith.mulf %41, %43 : vector<8x128xf32>
    %53 = math.tanh %52 : vector<8x128xf32>
    %54 = arith.mulf %51, %53 : vector<8x128xf32>
    %55 = arith.truncf %54 : vector<8x128xf32> to vector<8x128xbf16>
    %cst_27 = arith.constant dense<0.000000e+00> : vector<8x128xf32>
    %56 = tpu.matmul %55, %2, %cst_27 {dimension_numbers = #tpu.dot_dimension_numbers<[1], [0], [0], [1], [0, 0, 1, 1], [], []>} : vector<8x128xbf16>, vector<128x128xbf16>, vector<8x128xf32> -> vector<8x128xf32>
    %57 = vector.broadcast %9 : vector<1x128xf32> to vector<8x128xf32>
    %58 = arith.addf %56, %57 : vector<8x128xf32>
    %59 = vector.extract_strided_slice %58 {offsets = [0, 1], sizes = [8, 8], strides = [1, 1]} : vector<8x128xf32> to vector<8x8xf32>
    %60 = math.tanh %59 : vector<8x8xf32>
    %c0_28 = arith.constant 0 : index
    %c0_29 = arith.constant 0 : index
    %61 = vector.load %arg1[%c0_28, %c0_29] : memref<8x8xf32, #tpu.memory_space<vmem>>, vector<8x8xf32>
    %62 = arith.subf %61, %60 : vector<8x8xf32>
    %63 = arith.mulf %62, %62 : vector<8x8xf32>
    %64 = vector.broadcast %10 : vector<1x8xf32> to vector<8x8xf32>
    %65 = arith.mulf %63, %64 : vector<8x8xf32>
    %cst_30 = arith.constant dense<0.000000e+00> : vector<8xf32>
    %66 = vector.multi_reduction <add>, %65, %cst_30 [1] : vector<8x8xf32> to vector<8xf32>
    %67 = vector.shape_cast %66 : vector<8xf32> to vector<8x1xf32>
    %68 = tpu.iota {dimensions = array<i32: 1>} : vector<8x128xi32>
    %c1_i32 = arith.constant 1 : i32
    %69 = vector.broadcast %c1_i32 : i32 to vector<8x128xi32>
    %70 = arith.cmpi eq, %68, %69 : vector<8x128xi32>
    %71 = vector.shape_cast %67 : vector<8x1xf32> to vector<8x1xf32>
    %72 = vector.broadcast %71 : vector<8x1xf32> to vector<8x128xf32>
    %73 = arith.select %70, %72, %58 : vector<8x128xi1>, vector<8x128xf32>
    %c0_31 = arith.constant 0 : index
    %c0_32 = arith.constant 0 : index
    %74 = vector.load %arg5[%c0_31, %c0_32] : memref<8x128xf32, #tpu.memory_space<vmem>>, vector<8x128xf32>
    tpu.vector_store %arg5[%c0_31, %c0_32], %73 {strides = array<i32>} : memref<8x128xf32, #tpu.memory_space<vmem>>, vector<8x128xf32>,
    return
  }
}

</mosaic_0001>

<llo_original>
// kernel: tpu_custom_call.1
$region0: #{tpu_custom_call.1}
  #allocation0 [shape = 'u32[]', space=smem, size = 0x4, offset = 0x4, fixed_abs, tag = 'smem constant byte address 0x4 - core index']
  #allocation1 [shape = 'u32[72,128]{1,0:T(1,128)}', space=vmem, size = 0x9000, scoped, tag = 'internal scratch']
  %s0 = inlined_call_operand.hbm [shape: f32[8,16], index: 0, kind: input, shape index: {}]
  %s1 = inlined_call_operand.hbm [shape: f32[8,8], index: 1, kind: input, shape index: {}]
  %s2 = inlined_call_operand.hbm [shape: bf16[128,768], index: 2, kind: input, shape index: {}]
  %s3 = inlined_call_operand.hbm [shape: bf16[272,128], index: 3, kind: input, shape index: {}]
  %s4 = inlined_call_operand.hbm [shape: f32[1,1152], index: 4, kind: input, shape index: {}]
  %s5 = inlined_call_operand.hbm [shape: f32[8,128], index: 5, kind: output, shape index: {}]
  %s6 = sld [smem:[#allocation0]]
  $region50: #{tpu_custom_call.1} parent=0
    _
  %s8 = ssub.s32 1, %s6
  %s9 = scalar_select 0, %s8, %s6
  $region1: #{tpu_custom_call.1} parent=0
    #allocation2 [shape = 'u8[4096]{0}', space=vmem, size = 0x1000, scoped, tag = 'input window, operand 0, single buffered']
    #allocation3 [shape = 's32[1]{0}', space=sflag, size = 0x4, scoped, tag = 'scoped memory for tpu_custom_call.1']
    #allocation4 [shape = 's32[1]{0}', space=sflag, size = 0x4, scoped, tag = 'scoped memory for tpu_custom_call.1']
    #allocation5 [shape = 'u8[4096]{0}', space=vmem, size = 0x1000, scoped, tag = 'input window, operand 1, single buffered']
    #allocation6 [shape = 's32[1]{0}', space=sflag, size = 0x4, scoped, tag = 'scoped memory for tpu_custom_call.1']
    #allocation7 [shape = 'u8[196608]{0}', space=vmem, size = 0x30000, scoped, tag = 'input window, operand 2, single buffered']
    #allocation8 [shape = 'u8[69632]{0}', space=vmem, size = 0x11000, scoped, tag = 'input window, operand 3, single buffered']
    #allocation9 [shape = 's32[1]{0}', space=sflag, size = 0x4, scoped, tag = 'scoped memory for tpu_custom_call.1']
    #allocation10 [shape = 'u8[4608]{0}', space=vmem, size = 0x1400, scoped, tag = 'input window, operand 4, single buffered']
    #allocation11 [shape = 'u8[4096]{0}', space=vmem, size = 0x1000, scoped, tag = 'output window, operand 0, single buffered']
    %10 = vsyncpa [#allocation3], 0
    %11 = vsyncpa [#allocation6], 0
    %12 = vsyncpa [#allocation9], 0
    %13 = vsyncpa [#allocation4], 0
    // Predicated region
    $region2: #{tpu_custom_call.1} parent=1 // pred_check
      _
    $region3: #{tpu_custom_call.1} parent=1 // pred_check_branch
      %15 = sbr.rel (0) target = $region5
    $region4: #{tpu_custom_call.1} parent=1 // pred_region
      %17 = vsyncadd [#allocation3], 0
      %s19 = sshll.u32 %s0, 4
      %s20 = int_to_ptr.hbm [resolvable:$true] %s19
      %s21 = sshll.u32 [#allocation2], 4
      %s22 = int_to_ptr.vmem [resolvable:$true] %s21
      %24 = dma.hbm_to_vmem [thread:$0]  %s20, 128, %s22, [#allocation3]
    $region5: #{tpu_custom_call.1} parent=1 // pred_fallthru
      _
    // Predicated region
    $region6: #{tpu_custom_call.1} parent=1 // pred_check
      _
    $region7: #{tpu_custom_call.1} parent=1 // pred_check_branch
      %26 = sbr.rel (0) target = $region9
    $region8: #{tpu_custom_call.1} parent=1 // pred_region
      %28 = vsyncadd [#allocation6], 0
      %s30 = sshll.u32 %s1, 4
      %s31 = int_to_ptr.hbm [resolvable:$true] %s30
      %s32 = sshll.u32 [#allocation5], 4
      %s33 = int_to_ptr.vmem [resolvable:$true] %s32
      %35 = dma.hbm_to_vmem [thread:$0]  %s31, 128, %s33, [#allocation6]
    $region9: #{tpu_custom_call.1} parent=1 // pred_fallthru
      _
    // Predicated region
    $region10: #{tpu_custom_call.1} parent=1 // pred_check
      _
    $region11: #{tpu_custom_call.1} parent=1 // pred_check_branch
      %37 = sbr.rel (0) target = $region13
    $region12: #{tpu_custom_call.1} parent=1 // pred_region
      %39 = vsyncadd [#allocation6], 0
      %s40 = sshll.u32 %s2, 4
      %s41 = int_to_ptr.hbm [resolvable:$true] %s40
      %s42 = sshll.u32 [#allocation7], 4
      %s43 = int_to_ptr.vmem [resolvable:$true] %s42
      %48 = dma.hbm_to_vmem [thread:$0]  %s41, 6144, %s43, [#allocation6], 384, 384, 24
    $region13: #{tpu_custom_call.1} parent=1 // pred_fallthru
      _
    // Predicated region
    $region14: #{tpu_custom_call.1} parent=1 // pred_check
      _
    $region15: #{tpu_custom_call.1} parent=1 // pred_check_branch
      %50 = sbr.rel (0) target = $region17
    $region16: #{tpu_custom_call.1} parent=1 // pred_region
      %52 = vsyncadd [#allocation9], 0
      %s53 = sshll.u32 %s3, 4
      %s54 = int_to_ptr.hbm [resolvable:$true] %s53
      %s55 = sshll.u32 [#allocation8], 4
      %s56 = int_to_ptr.vmem [resolvable:$true] %s55
      %61 = dma.hbm_to_vmem [thread:$0]  %s54, 2176, %s56, [#allocation9], 64, 64, 4
    $region17: #{tpu_custom_call.1} parent=1 // pred_fallthru
      _
    // Predicated region
    $region18: #{tpu_custom_call.1} parent=1 // pred_check
      _
    $region19: #{tpu_custom_call.1} parent=1 // pred_check_branch
      %63 = sbr.rel (0) target = $region21
    $region20: #{tpu_custom_call.1} parent=1 // pred_region
      %65 = vsyncadd [#allocation9], 0
      %s67 = sshll.u32 %s4, 4
      %s68 = int_to_ptr.hbm [resolvable:$true] %s67
      %s69 = sshll.u32 [#allocation10], 4
      %s70 = int_to_ptr.vmem [resolvable:$true] %s69
      %72 = dma.hbm_to_vmem [thread:$0]  %s68, 144, %s70, [#allocation9]
    $region21: #{tpu_custom_call.1} parent=1 // pred_fallthru
      _
    // Predicated region
    $region22: #{tpu_custom_call.1} parent=1 // pred_check
      _
    $region23: #{tpu_custom_call.1} parent=1 // pred_check_branch
      %74 = sbr.rel (0) target = $region25
    $region24: #{tpu_custom_call.1} parent=1 // pred_region
      %76 = dma.done [#allocation3], 128
    $region25: #{tpu_custom_call.1} parent=1 // pred_fallthru
      _
    // Predicated region
    $region26: #{tpu_custom_call.1} parent=1 // pred_check
      _
    $region27: #{tpu_custom_call.1} parent=1 // pred_check_branch
      %78 = sbr.rel (0) target = $region29
    $region28: #{tpu_custom_call.1} parent=1 // pred_region
      %80 = dma.done [#allocation6], 128
    $region29: #{tpu_custom_call.1} parent=1 // pred_fallthru
      _
    // Predicated region
    $region30: #{tpu_custom_call.1} parent=1 // pred_check
      _
    $region31: #{tpu_custom_call.1} parent=1 // pred_check_branch
      %82 = sbr.rel (0) target = $region33
    $region32: #{tpu_custom_call.1} parent=1 // pred_region
      %84 = dma.done [#allocation6], 6144
    $region33: #{tpu_custom_call.1} parent=1 // pred_fallthru
      _
    // Predicated region
    $region34: #{tpu_custom_call.1} parent=1 // pred_check
      _
    $region35: #{tpu_custom_call.1} parent=1 // pred_check_branch
      %86 = sbr.rel (0) target = $region37
    $region36: #{tpu_custom_call.1} parent=1 // pred_region
      %88 = dma.done [#allocation9], 2176
    $region37: #{tpu_custom_call.1} parent=1 // pred_fallthru
      _
    // Predicated region
    $region38: #{tpu_custom_call.1} parent=1 // pred_check
      _
    $region39: #{tpu_custom_call.1} parent=1 // pred_check_branch
      %90 = sbr.rel (0) target = $region41
    $region40: #{tpu_custom_call.1} parent=1 // pred_region
      %92 = dma.done [#allocation9], 144
    $region41: #{tpu_custom_call.1} parent=1 // pred_fallthru
      _
    %v94 = vld [vmem:[#allocation7] sm:$0xff]
    %v95 = vld [vmem:[#allocation7 + $0x18] sm:$0xff]
    %v96 = vld [vmem:[#allocation7 + $0x30] sm:$0xff]
    %v97 = vld [vmem:[#allocation7 + $0x48] sm:$0xff]
    %v98 = vld [vmem:[#allocation7 + $0x60] sm:$0xff]
    %v99 = vld [vmem:[#allocation7 + $0x78] sm:$0xff]
    %v100 = vld [vmem:[#allocation7 + $0x90] sm:$0xff]
    %v101 = vld [vmem:[#allocation7 + $0xa8] sm:$0xff]
    %v102 = vld [vmem:[#allocation7 + $0xc0] sm:$0xff]
    %v103 = vld [vmem:[#allocation7 + $0xd8] sm:$0xff]
    %v104 = vld [vmem:[#allocation7 + $0xf0] sm:$0xff]
    %v105 = vld [vmem:[#allocation7 + $0x108] sm:$0xff]
    %v106 = vld [vmem:[#allocation7 + $0x120] sm:$0xff]
    %v107 = vld [vmem:[#allocation7 + $0x138] sm:$0xff]
    %v108 = vld [vmem:[#allocation7 + $0x150] sm:$0xff]
    %v109 = vld [vmem:[#allocation7 + $0x168] sm:$0xff]
    %v110 = vld [vmem:[#allocation7 + $0x8] sm:$0xff]
    %v111 = vld [vmem:[#allocation7 + $0x10] sm:$0xf]
    %v112 = vld [vmem:[#allocation7 + $0x20] sm:$0xff]
    %v113 = vld [vmem:[#allocation7 + $0x28] sm:$0xf]
    %v114 = vld [vmem:[#allocation7 + $0x38] sm:$0xff]
    %v115 = vld [vmem:[#allocation7 + $0x40] sm:$0xf]
    %v116 = vld [vmem:[#allocation7 + $0x50] sm:$0xff]
    %v117 = vld [vmem:[#allocation7 + $0x58] sm:$0xf]
    %v118 = vld [vmem:[#allocation7 + $0x68] sm:$0xff]
    %v119 = vld [vmem:[#allocation7 + $0x70] sm:$0xf]
    %v120 = vld [vmem:[#allocation7 + $0x80] sm:$0xff]
    %v121 = vld [vmem:[#allocation7 + $0x88] sm:$0xf]
    %v122 = vld [vmem:[#allocation7 + $0x98] sm:$0xff]
    %v123 = vld [vmem:[#allocation7 + $0xa0] sm:$0xf]
    %v124 = vld [vmem:[#allocation7 + $0xb0] sm:$0xff]
    %v125 = vld [vmem:[#allocation7 + $0xb8] sm:$0xf]
    %v126 = vld [vmem:[#allocation7 + $0xc8] sm:$0xff]
    %v127 = vld [vmem:[#allocation7 + $0xd0] sm:$0xf]
    %v128 = vld [vmem:[#allocation7 + $0xe0] sm:$0xff]
    %v129 = vld [vmem:[#allocation7 + $0xe8] sm:$0xf]
    %v130 = vld [vmem:[#allocation7 + $0xf8] sm:$0xff]
    %v131 = vld [vmem:[#allocation7 + $0x100] sm:$0xf]
    %v132 = vld [vmem:[#allocation7 + $0x110] sm:$0xff]
    %v133 = vld [vmem:[#allocation7 + $0x118] sm:$0xf]
    %v134 = vld [vmem:[#allocation7 + $0x128] sm:$0xff]
    %v135 = vld [vmem:[#allocation7 + $0x130] sm:$0xf]
    %v136 = vld [vmem:[#allocation7 + $0x140] sm:$0xff]
    %v137 = vld [vmem:[#allocation7 + $0x148] sm:$0xf]
    %v138 = vld [vmem:[#allocation7 + $0x158] sm:$0xff]
    %v139 = vld [vmem:[#allocation7 + $0x160] sm:$0xf]
    %v140 = vld [vmem:[#allocation7 + $0x170] sm:$0xff]
    %v141 = vld [vmem:[#allocation7 + $0x178] sm:$0xf]
    %v142 = vld [vmem:[#allocation7 + $0x14] sm:$0xf]
    %v143 = vld [vmem:[#allocation7 + $0x2c] sm:$0xf]
    %v144 = vld [vmem:[#allocation7 + $0x44] sm:$0xf]
    %v145 = vld [vmem:[#allocation7 + $0x5c] sm:$0xf]
    %v146 = vld [vmem:[#allocation7 + $0x74] sm:$0xf]
    %v147 = vld [vmem:[#allocation7 + $0x8c] sm:$0xf]
    %v148 = vld [vmem:[#allocation7 + $0xa4] sm:$0xf]
    %v149 = vld [vmem:[#allocation7 + $0xbc] sm:$0xf]
    %v150 = vld [vmem:[#allocation7 + $0xd4] sm:$0xf]
    %v151 = vld [vmem:[#allocation7 + $0xec] sm:$0xf]
    %v152 = vld [vmem:[#allocation7 + $0x104] sm:$0xf]
    %v153 = vld [vmem:[#allocation7 + $0x11c] sm:$0xf]
    %v154 = vld [vmem:[#allocation7 + $0x134] sm:$0xf]
    %v155 = vld [vmem:[#allocation7 + $0x14c] sm:$0xf]
    %v156 = vld [vmem:[#allocation7 + $0x164] sm:$0xf]
    %v157 = vld [vmem:[#allocation7 + $0x17c] sm:$0xf]
    %v158 = vld [vmem:[#allocation8] sm:$0xf]
    %v159 = vld [vmem:[#allocation8 + $0x4] sm:$0xf]
    %v160 = vld [vmem:[#allocation8 + $0x8] sm:$0xf]
    %v161 = vld [vmem:[#allocation8 + $0xc] sm:$0xf]
    %v162 = vld [vmem:[#allocation8 + $0x10] sm:$0xf]
    %v163 = vld [vmem:[#allocation8 + $0x14] sm:$0xf]
    %v164 = vld [vmem:[#allocation8 + $0x18] sm:$0xf]
    %v165 = vld [vmem:[#allocation8 + $0x1c] sm:$0xf]
    %v166 = vld [vmem:[#allocation8 + $0x20] sm:$0xf]
    %v167 = vld [vmem:[#allocation8 + $0x24] sm:$0xf]
    %v168 = vld [vmem:[#allocation8 + $0x28] sm:$0xf]
    %v169 = vld [vmem:[#allocation8 + $0x2c] sm:$0xf]
    %v170 = vld [vmem:[#allocation8 + $0x30] sm:$0xf]
    %v171 = vld [vmem:[#allocation8 + $0x34] sm:$0xf]
    %v172 = vld [vmem:[#allocation8 + $0x38] sm:$0xf]
    %v173 = vld [vmem:[#allocation8 + $0x3c] sm:$0xf]
    %v174 = vld [vmem:[#allocation8 + $0x40] sm:$0xf]
    %v175 = vld [vmem:[#allocation8 + $0x44] sm:$0xf]
    %v176 = vld [vmem:[#allocation8 + $0x48] sm:$0xf]
    %v177 = vld [vmem:[#allocation8 + $0x4c] sm:$0xf]
    %v178 = vld [vmem:[#allocation8 + $0x50] sm:$0xf]
    %v179 = vld [vmem:[#allocation8 + $0x54] sm:$0xf]
    %v180 = vld [vmem:[#allocation8 + $0x58] sm:$0xf]
    %v181 = vld [vmem:[#allocation8 + $0x5c] sm:$0xf]
    %v182 = vld [vmem:[#allocation8 + $0x60] sm:$0xf]
    %v183 = vld [vmem:[#allocation8 + $0x64] sm:$0xf]
    %v184 = vld [vmem:[#allocation8 + $0x68] sm:$0xf]
    %v185 = vld [vmem:[#allocation8 + $0x6c] sm:$0xf]
    %v186 = vld [vmem:[#allocation8 + $0x70] sm:$0xf]
    %v187 = vld [vmem:[#allocation8 + $0x74] sm:$0xf]
    %v188 = vld [vmem:[#allocation8 + $0x78] sm:$0xf]
    %v189 = vld [vmem:[#allocation8 + $0x7c] sm:$0xf]
    %v190 = vld [vmem:[#allocation8 + $0x80] sm:$0xf]
    %v191 = vld [vmem:[#allocation8 + $0x84] sm:$0xf]
    %v192 = vld [vmem:[#allocation10] sm:$0x1]
    %v193 = vld [vmem:[#allocation10 + $0x1] sm:$0x3]
    %v194 = vld [vmem:[#allocation10 + $0x3] sm:$0x1]
    %v195 = vld [vmem:[#allocation10 + $0x4] sm:$0x7]
    %v196 = vld [vmem:[#allocation10 + $0x7] sm:$0x1]
    %v197 = vld [vmem:[#allocation10 + $0x8] sm:$0x1]
    %v198 = vld [vmem:[#allocation2] sm:$0xff]
    %v199 = vpack.c.bf16 %v198, %v198
    %v201 = vperm.slane %v192, 0
    %v205 = vunpack.c.l.b16 %v158
    %v206 = vunpack.c.l.b16 %v159
    %v207 = vpack.c.b16 %v206, %v205
    %vm209 = vcmask 130048
    %v211 = vsel %vm209, %v199, 0
    %213 = vmatpush.bf16.msra.mxu0 0
    %214 = vmatpush.bf16.msra.mxu0 0
    %215 = vmatpush.bf16.msra.mxu0 0
    %216 = vmatpush.bf16.msra.mxu0 0
    %217 = vmatpush.bf16.msra.mxu0 0
    %218 = vmatpush.bf16.msra.mxu0 0
    %219 = vmatpush.bf16.msra.mxu0 0
    %220 = vmatpush.bf16.msra.mxu0 %v207
    %221 = vmatmul.bf16.gmra.mxu0 %v211
    %v222 = vpop.f32.mrf.mxu0
    %v223 = vadd.f32 %v201, %v222
    %v224 = vpop.f32.mrf.mxu0
    %225 = vdwg.mxu0
    %v226 = vmax.f32 %v223, 0.0
    %v227 = vpack.c.bf16 %v226, %v226
    %v229 = vperm.slane %v193, 0
    %v230 = vperm.slane %v193, 1
    %v249 = vunpack.c.l.b16 %v94
    %v250 = vunpack.c.h.b16 %v94
    %v251 = vunpack.c.l.b16 %v95
    %v252 = vunpack.c.h.b16 %v95
    %v253 = vunpack.c.l.b16 %v96
    %v254 = vunpack.c.h.b16 %v96
    %v255 = vunpack.c.l.b16 %v97
    %v256 = vunpack.c.h.b16 %v97
    %v257 = vunpack.c.l.b16 %v98
    %v258 = vunpack.c.h.b16 %v98
    %v259 = vunpack.c.l.b16 %v99
    %v260 = vunpack.c.h.b16 %v99
    %v261 = vunpack.c.l.b16 %v100
    %v262 = vunpack.c.h.b16 %v100
    %v263 = vunpack.c.l.b16 %v101
    %v264 = vunpack.c.h.b16 %v101
    %v265 = vunpack.c.l.b16 %v102
    %v266 = vunpack.c.h.b16 %v102
    %v267 = vunpack.c.l.b16 %v103
    %v268 = vunpack.c.h.b16 %v103
    %v269 = vunpack.c.l.b16 %v104
    %v270 = vunpack.c.h.b16 %v104
    %v271 = vunpack.c.l.b16 %v105
    %v272 = vunpack.c.h.b16 %v105
    %v273 = vunpack.c.l.b16 %v106
    %v274 = vunpack.c.h.b16 %v106
    %v275 = vunpack.c.l.b16 %v107
    %v276 = vunpack.c.h.b16 %v107
    %v277 = vunpack.c.l.b16 %v108
    %v278 = vunpack.c.h.b16 %v108
    %v279 = vunpack.c.l.b16 %v109
    %v280 = vunpack.c.h.b16 %v109
    %v281 = vpack.c.b16 %v251, %v249
    %v282 = vpack.c.b16 %v252, %v250
    %v283 = vpack.c.b16 %v255, %v253
    %v284 = vpack.c.b16 %v256, %v254
    %v285 = vpack.c.b16 %v259, %v257
    %v286 = vpack.c.b16 %v260, %v258
    %v287 = vpack.c.b16 %v263, %v261
    %v288 = vpack.c.b16 %v264, %v262
    %v289 = vpack.c.b16 %v267, %v265
    %v290 = vpack.c.b16 %v268, %v266
    %v291 = vpack.c.b16 %v271, %v269
    %v292 = vpack.c.b16 %v272, %v270
    %v293 = vpack.c.b16 %v275, %v273
    %v294 = vpack.c.b16 %v276, %v274
    %v295 = vpack.c.b16 %v279, %v277
    %v296 = vpack.c.b16 %v280, %v278
    %313 = vmatpush.bf16.msra.mxu0 %v295
    %314 = vmatpush.bf16.msra.mxu0 %v293
    %315 = vmatpush.bf16.msra.mxu0 %v291
    %316 = vmatpush.bf16.msra.mxu0 %v289
    %317 = vmatpush.bf16.msra.mxu0 %v287
    %318 = vmatpush.bf16.msra.mxu0 %v285
    %319 = vmatpush.bf16.msra.mxu0 %v283
    %320 = vmatpush.bf16.msra.mxu0 %v281
    %321 = vmatmul.bf16.gmra.mxu0 %v227
    %v322 = vpop.f32.mrf.mxu0
    %v323 = vadd.f32 %v229, %v322
    %v324 = vpop.f32.mrf.mxu0
    %325 = vdwg.mxu0
    %326 = vmatpush.bf16.msra.mxu0 %v296
    %327 = vmatpush.bf16.msra.mxu0 %v294
    %328 = vmatpush.bf16.msra.mxu0 %v292
    %329 = vmatpush.bf16.msra.mxu0 %v290
    %330 = vmatpush.bf16.msra.mxu0 %v288
    %331 = vmatpush.bf16.msra.mxu0 %v286
    %332 = vmatpush.bf16.msra.mxu0 %v284
    %333 = vmatpush.bf16.msra.mxu0 %v282
    %334 = vmatmul.bf16.gmra.mxu0 %v227
    %v335 = vpop.f32.mrf.mxu0
    %v336 = vadd.f32 %v230, %v335
    %v337 = vpop.f32.mrf.mxu0
    %338 = vdwg.mxu0
    %v339 = vmax.f32 %v323, 0.0
    %v340 = vmax.f32 %v336, 0.0
    %v341 = vpack.c.bf16 %v339, %v339
    %v342 = vpack.c.bf16 %v340, %v340
    %v344 = vperm.slane %v194, 0
    %v378 = vunpack.c.l.b16 %v160
    %v379 = vunpack.c.l.b16 %v161
    %v380 = vunpack.c.l.b16 %v162
    %v381 = vunpack.c.l.b16 %v163
    %v382 = vunpack.c.l.b16 %v164
    %v383 = vunpack.c.l.b16 %v165
    %v384 = vunpack.c.l.b16 %v166
    %v385 = vunpack.c.l.b16 %v167
    %v386 = vunpack.c.l.b16 %v168
    %v387 = vunpack.c.l.b16 %v169
    %v388 = vunpack.c.l.b16 %v170
    %v389 = vunpack.c.l.b16 %v171
    %v390 = vunpack.c.l.b16 %v172
    %v391 = vunpack.c.l.b16 %v173
    %v392 = vunpack.c.l.b16 %v174
    %v393 = vunpack.c.l.b16 %v175
    %v394 = vunpack.c.l.b16 %v176
    %v395 = vunpack.c.l.b16 %v177
    %v396 = vunpack.c.l.b16 %v178
    %v397 = vunpack.c.l.b16 %v179
    %v398 = vunpack.c.l.b16 %v180
    %v399 = vunpack.c.l.b16 %v181
    %v400 = vunpack.c.l.b16 %v182
    %v401 = vunpack.c.l.b16 %v183
    %v402 = vunpack.c.l.b16 %v184
    %v403 = vunpack.c.l.b16 %v185
    %v404 = vunpack.c.l.b16 %v186
    %v405 = vunpack.c.l.b16 %v187
    %v406 = vunpack.c.l.b16 %v188
    %v407 = vunpack.c.l.b16 %v189
    %v408 = vunpack.c.l.b16 %v190
    %v409 = vunpack.c.l.b16 %v191
    %v410 = vpack.c.b16 %v379, %v378
    %v411 = vpack.c.b16 %v381, %v380
    %v412 = vpack.c.b16 %v383, %v382
    %v413 = vpack.c.b16 %v385, %v384
    %v414 = vpack.c.b16 %v387, %v386
    %v415 = vpack.c.b16 %v389, %v388
    %v416 = vpack.c.b16 %v391, %v390
    %v417 = vpack.c.b16 %v393, %v392
    %v418 = vpack.c.b16 %v395, %v394
    %v419 = vpack.c.b16 %v397, %v396
    %v420 = vpack.c.b16 %v399, %v398
    %v421 = vpack.c.b16 %v401, %v400
    %v422 = vpack.c.b16 %v403, %v402
    %v423 = vpack.c.b16 %v405, %v404
    %v424 = vpack.c.b16 %v407, %v406
    %v425 = vpack.c.b16 %v409, %v408
    %442 = vmatpush.bf16.msra.mxu0 %v417
    %443 = vmatpush.bf16.msra.mxu0 %v416
    %444 = vmatpush.bf16.msra.mxu0 %v415
    %445 = vmatpush.bf16.msra.mxu0 %v414
    %446 = vmatpush.bf16.msra.mxu0 %v413
    %447 = vmatpush.bf16.msra.mxu0 %v412
    %448 = vmatpush.bf16.msra.mxu0 %v411
    %449 = vmatpush.bf16.msra.mxu0 %v410
    %450 = vmatmul.bf16.gmra.mxu0 %v341
    %v451 = vpop.f32.mrf.mxu0
    %v452 = vadd.f32 %v344, %v451
    %v453 = vpop.f32.mrf.mxu0
    %454 = vdwg.mxu0
    %455 = vmatpush.bf16.msra.mxu0 %v425
    %456 = vmatpush.bf16.msra.mxu0 %v424
    %457 = vmatpush.bf16.msra.mxu0 %v423
    %458 = vmatpush.bf16.msra.mxu0 %v422
    %459 = vmatpush.bf16.msra.mxu0 %v421
    %460 = vmatpush.bf16.msra.mxu0 %v420
    %461 = vmatpush.bf16.msra.mxu0 %v419
    %462 = vmatpush.bf16.msra.mxu0 %v418
    %463 = vmatmul.bf16.gmra.mxu0 %v342
    %v464 = vpop.f32.mrf.mxu0
    %v465 = vadd.f32 %v452, %v464
    %v466 = vpop.f32.mrf.mxu0
    %467 = vdwg.mxu0
    %v468 = vmax.f32 %v465, 0.0
    %v469 = vpack.c.bf16 %v468, %v468
    %v471 = vperm.slane %v195, 0
    %v472 = vperm.slane %v195, 1
    %v473 = vperm.slane %v195, 2
    %v509 = vunpack.c.l.b16 %v110
    %v510 = vunpack.c.h.b16 %v110
    %v511 = vunpack.c.l.b16 %v111
    %v512 = vunpack.c.l.b16 %v112
    %v513 = vunpack.c.h.b16 %v112
    %v514 = vunpack.c.l.b16 %v113
    %v515 = vunpack.c.l.b16 %v114
    %v516 = vunpack.c.h.b16 %v114
    %v517 = vunpack.c.l.b16 %v115
    %v518 = vunpack.c.l.b16 %v116
    %v519 = vunpack.c.h.b16 %v116
    %v520 = vunpack.c.l.b16 %v117
    %v521 = vunpack.c.l.b16 %v118
    %v522 = vunpack.c.h.b16 %v118
    %v523 = vunpack.c.l.b16 %v119
    %v524 = vunpack.c.l.b16 %v120
    %v525 = vunpack.c.h.b16 %v120
    %v526 = vunpack.c.l.b16 %v121
    %v527 = vunpack.c.l.b16 %v122
    %v528 = vunpack.c.h.b16 %v122
    %v529 = vunpack.c.l.b16 %v123
    %v530 = vunpack.c.l.b16 %v124
    %v531 = vunpack.c.h.b16 %v124
    %v532 = vunpack.c.l.b16 %v125
    %v533 = vunpack.c.l.b16 %v126
    %v534 = vunpack.c.h.b16 %v126
    %v535 = vunpack.c.l.b16 %v127
    %v536 = vunpack.c.l.b16 %v128
    %v537 = vunpack.c.h.b16 %v128
    %v538 = vunpack.c.l.b16 %v129
    %v539 = vunpack.c.l.b16 %v130
    %v540 = vunpack.c.h.b16 %v130
    %v541 = vunpack.c.l.b16 %v131
    %v542 = vunpack.c.l.b16 %v132
    %v543 = vunpack.c.h.b16 %v132
    %v544 = vunpack.c.l.b16 %v133
    %v545 = vunpack.c.l.b16 %v134
    %v546 = vunpack.c.h.b16 %v134
    %v547 = vunpack.c.l.b16 %v135
    %v548 = vunpack.c.l.b16 %v136
    %v549 = vunpack.c.h.b16 %v136
    %v550 = vunpack.c.l.b16 %v137
    %v551 = vunpack.c.l.b16 %v138
    %v552 = vunpack.c.h.b16 %v138
    %v553 = vunpack.c.l.b16 %v139
    %v554 = vunpack.c.l.b16 %v140
    %v555 = vunpack.c.h.b16 %v140
    %v556 = vunpack.c.l.b16 %v141
    %v557 = vpack.c.b16 %v512, %v509
    %v558 = vpack.c.b16 %v513, %v510
    %v559 = vpack.c.b16 %v514, %v511
    %v560 = vpack.c.b16 %v518, %v515
    %v561 = vpack.c.b16 %v519, %v516
    %v562 = vpack.c.b16 %v520, %v517
    %v563 = vpack.c.b16 %v524, %v521
    %v564 = vpack.c.b16 %v525, %v522
    %v565 = vpack.c.b16 %v526, %v523
    %v566 = vpack.c.b16 %v530, %v527
    %v567 = vpack.c.b16 %v531, %v528
    %v568 = vpack.c.b16 %v532, %v529
    %v569 = vpack.c.b16 %v536, %v533
    %v570 = vpack.c.b16 %v537, %v534
    %v571 = vpack.c.b16 %v538, %v535
    %v572 = vpack.c.b16 %v542, %v539
    %v573 = vpack.c.b16 %v543, %v540
    %v574 = vpack.c.b16 %v544, %v541
    %v575 = vpack.c.b16 %v548, %v545
    %v576 = vpack.c.b16 %v549, %v546
    %v577 = vpack.c.b16 %v550, %v547
    %v578 = vpack.c.b16 %v554, %v551
    %v579 = vpack.c.b16 %v555, %v552
    %v580 = vpack.c.b16 %v556, %v553
    %605 = vmatpush.bf16.msra.mxu0 %v578
    %606 = vmatpush.bf16.msra.mxu0 %v575
    %607 = vmatpush.bf16.msra.mxu0 %v572
    %608 = vmatpush.bf16.msra.mxu0 %v569
    %609 = vmatpush.bf16.msra.mxu0 %v566
    %610 = vmatpush.bf16.msra.mxu0 %v563
    %611 = vmatpush.bf16.msra.mxu0 %v560
    %612 = vmatpush.bf16.msra.mxu0 %v557
    %613 = vmatmul.bf16.gmra.mxu0 %v469
    %v614 = vpop.f32.mrf.mxu0
    %v615 = vadd.f32 %v471, %v614
    %v616 = vpop.f32.mrf.mxu0
    %617 = vdwg.mxu0
    %618 = vmatpush.bf16.msra.mxu0 %v579
    %619 = vmatpush.bf16.msra.mxu0 %v576
    %620 = vmatpush.bf16.msra.mxu0 %v573
    %621 = vmatpush.bf16.msra.mxu0 %v570
    %622 = vmatpush.bf16.msra.mxu0 %v567
    %623 = vmatpush.bf16.msra.mxu0 %v564
    %624 = vmatpush.bf16.msra.mxu0 %v561
    %625 = vmatpush.bf16.msra.mxu0 %v558
    %626 = vmatmul.bf16.gmra.mxu0 %v469
    %v627 = vpop.f32.mrf.mxu0
    %v628 = vadd.f32 %v472, %v627
    %v629 = vpop.f32.mrf.mxu0
    %630 = vdwg.mxu0
    %631 = vmatpush.bf16.msra.mxu0 %v580
    %632 = vmatpush.bf16.msra.mxu0 %v577
    %633 = vmatpush.bf16.msra.mxu0 %v574
    %634 = vmatpush.bf16.msra.mxu0 %v571
    %635 = vmatpush.bf16.msra.mxu0 %v568
    %636 = vmatpush.bf16.msra.mxu0 %v565
    %637 = vmatpush.bf16.msra.mxu0 %v562
    %638 = vmatpush.bf16.msra.mxu0 %v559
    %639 = vmatmul.bf16.gmra.mxu0 %v469
    %v640 = vpop.f32.mrf.mxu0
    %v641 = vadd.f32 %v473, %v640
    %v642 = vpop.f32.mrf.mxu0
    %643 = vdwg.mxu0
    %v644 = vmul.f32 %v615, 0.5
    %v645 = vtanh.pop %v644
    %v646 = vadd.f32 %v645, 1.0
    %v647 = vmul.f32 %v646, 0.5
    %v648 = vtanh.pop %v628
    %v649 = vmul.f32 %v641, 0.5
    %v650 = vtanh.pop %v649
    %v651 = vadd.f32 %v650, 1.0
    %v652 = vmul.f32 %v651, 0.5
    %v653 = vmul.f32 %v647, %v648
    %v654 = vtanh.pop %v653
    %v655 = vmul.f32 %v652, %v654
    %v656 = vpack.c.bf16 %v655, %v655
    %v658 = vperm.slane %v196, 0
    %v676 = vunpack.c.l.b16 %v142
    %v677 = vunpack.c.l.b16 %v143
    %v678 = vunpack.c.l.b16 %v144
    %v679 = vunpack.c.l.b16 %v145
    %v680 = vunpack.c.l.b16 %v146
    %v681 = vunpack.c.l.b16 %v147
    %v682 = vunpack.c.l.b16 %v148
    %v683 = vunpack.c.l.b16 %v149
    %v684 = vunpack.c.l.b16 %v150
    %v685 = vunpack.c.l.b16 %v151
    %v686 = vunpack.c.l.b16 %v152
    %v687 = vunpack.c.l.b16 %v153
    %v688 = vunpack.c.l.b16 %v154
    %v689 = vunpack.c.l.b16 %v155
    %v690 = vunpack.c.l.b16 %v156
    %v691 = vunpack.c.l.b16 %v157
    %v692 = vpack.c.b16 %v677, %v676
    %v693 = vpack.c.b16 %v679, %v678
    %v694 = vpack.c.b16 %v681, %v680
    %v695 = vpack.c.b16 %v683, %v682
    %v696 = vpack.c.b16 %v685, %v684
    %v697 = vpack.c.b16 %v687, %v686
    %v698 = vpack.c.b16 %v689, %v688
    %v699 = vpack.c.b16 %v691, %v690
    %708 = vmatpush.bf16.msra.mxu0 %v699
    %709 = vmatpush.bf16.msra.mxu0 %v698
    %710 = vmatpush.bf16.msra.mxu0 %v697
    %711 = vmatpush.bf16.msra.mxu0 %v696
    %712 = vmatpush.bf16.msra.mxu0 %v695
    %713 = vmatpush.bf16.msra.mxu0 %v694
    %714 = vmatpush.bf16.msra.mxu0 %v693
    %715 = vmatpush.bf16.msra.mxu0 %v692
    %716 = vmatmul.bf16.gmra.mxu0 %v656
    %v717 = vpop.f32.mrf.mxu0
    %v718 = vadd.f32 %v658, %v717
    %v719 = vpop.f32.mrf.mxu0
    %720 = vdwg.mxu0
    %v721 = vtanh.pop %v718
    %v722 = vld [vmem:[#allocation5] sm:$0xff]
    %724 = vrot.lane.b32.xlu0 %v721, 127
    %v725 = vpop.permute.xlu0 %724
    %v727 = vsub.f32 %v722, %v725
    %v728 = vmul.f32 %v727, %v727
    %v730 = vperm.slane %v197, 0
    %v732 = vmul.f32 %v728, %v730
    %vm733 = vcmask 64512
    %v734 = vsel %vm733, %v732, 0.0
    %735 = vadd.xlane.f32.xlu0 %v734
    %v736 = vpop.xlane.xlu0 %735
    %v737 = vlaneseq
    %v738 = vand.u32 %v737, 127
    %vm739 = vcmp.eq.s32.totalorder %v738, 1
    %v740 = vsel %vm739, %v736, %v718
    %741 = vst [vmem:[#allocation11] sm:$0xff] %v740
    // Predicated region
    $region42: #{tpu_custom_call.1} parent=1 // pred_check
      _
    $region43: #{tpu_custom_call.1} parent=1 // pred_check_branch
      %743 = sbr.rel (0) target = $region45
    $region44: #{tpu_custom_call.1} parent=1 // pred_region
      %745 = vsyncadd [#allocation4], 0
      %s747 = sshll.u32 [#allocation11], 4
      %s748 = int_to_ptr.vmem [resolvable:$true] %s747
      %s749 = sshll.u32 %s5, 4
      %s750 = int_to_ptr.hbm [resolvable:$true] %s749
      %752 = dma.vmem_to_hbm [thread:$0]  %s748, 128, %s750, [#allocation4]
    $region45: #{tpu_custom_call.1} parent=1 // pred_fallthru
      _
    // Predicated region
    $region46: #{tpu_custom_call.1} parent=1 // pred_check
      _
    $region47: #{tpu_custom_call.1} parent=1 // pred_check_branch
      %754 = sbr.rel (0) target = $region49
    $region48: #{tpu_custom_call.1} parent=1 // pred_region
      %756 = dma.done [#allocation4], 128
    $region49: #{tpu_custom_call.1} parent=1 // pred_fallthru
      _
    %757 = vsyncpa [#allocation3], 1
    %758 = vsyncpa [#allocation6], 1
    %759 = vsyncpa [#allocation9], 1
    %760 = vsyncpa [#allocation4], 1

</llo_original>
